<compile_context>
chip_gen: v7x
topology: tpu7x:2x2x1
jax: 0.10.0
libtpu: 0.0.40
codegen_flags: <defaults>
</compile_context>

<pallas_src>
import jax
import jax.numpy as jnp
from jax.experimental import pallas as pl
from jax.experimental.pallas import tpu as pltpu


def _round_up(x, m):
    return ((x + m - 1) // m) * m


def stable_softmax_kernel(x_ref, o_ref):
    # Compute in f32 regardless of input dtype.
    x = x_ref[...].astype(jnp.float32)
    # c = max over axis 0 (torch.max(list, dim=0).values), broadcast-subtract.
    c = jnp.max(x, axis=0, keepdims=True)
    x_exp = jnp.exp(x - c)
    # total = sum over axis 0 with keepdim=True.
    total = jnp.sum(x_exp, axis=0, keepdims=True)
    # One exact reciprocal per lane, then a broadcast multiply (cheaper than
    # an (N, TILE_D)-wide divide).
    inv = pl.reciprocal(total, approx=False)
    o_ref[...] = (x_exp * inv).astype(o_ref.dtype)


def stable_softmax(x, *, max_tile_d=2048, vmem_budget_bytes=12 * 1024 * 1024):
    """Softmax along axis 0 of a 2-D array, numerically stabilized."""
    n, d = x.shape

    # --- pick the lane-tile width -----------------------------------------
    # Budget counts in + out tiles, double-buffered, at f32 width (the compute
    # dtype), so it is conservative for bf16 inputs too.
    bytes_per_lane = 4 * n * 4  # 2 arrays * 2 buffers * N rows * 4 B (f32)
    budget_tile = max(128, (vmem_budget_bytes // bytes_per_lane) // 128 * 128)
    d_128 = _round_up(d, 128)
    tile_d = min(d_128, max_tile_d, budget_tile)

    # --- pad the lane axis so the grid divides evenly ----------------------
    d_pad = _round_up(d, tile_d)
    x_p = x if d_pad == d else jnp.pad(x, ((0, 0), (0, d_pad - d)))
    grid = (d_pad // tile_d,)

    out = pl.pallas_call(
        stable_softmax_kernel,
        out_shape=jax.ShapeDtypeStruct((n, d_pad), x.dtype),
        grid=grid,
        in_specs=[pl.BlockSpec((n, tile_d), lambda j: (0, j))],
        out_specs=pl.BlockSpec((n, tile_d), lambda j: (0, j)),
        compiler_params=pltpu.CompilerParams(
            dimension_semantics=("parallel",)
        ),
    )(x_p)

    return out if d_pad == d else out[:, :d]


def _reference(x):
    xf = x.astype(jnp.float32)
    e = jnp.exp(xf - jnp.max(xf, axis=0, keepdims=True))
    return (e / jnp.sum(e, axis=0, keepdims=True)).astype(x.dtype)


if __name__ == "__main__":
    key = jax.random.PRNGKey(0)

    # Primary test: shape consistent with the module (seq=8 rows along the
    # reduction axis, hidden=128 lanes), f32.
    x = jax.random.normal(key, (8, 128), dtype=jnp.float32) * 5.0
    out = jax.block_until_ready(stable_softmax(x))
    ref = _reference(x)
    assert out.shape == x.shape and out.dtype == x.dtype
    assert jnp.allclose(out, ref, atol=1e-6, rtol=1e-6)

    # Secondary test: non-multiple-of-128 lane width (exercises padding) and
    # a forced multi-tile grid (exercises the pipelined path).
    k2 = jax.random.PRNGKey(0)
    x2 = jax.random.normal(k2, (16, 200), dtype=jnp.float32) * 3.0
    out2 = jax.block_until_ready(stable_softmax(x2, max_tile_d=128))
    ref2 = _reference(x2)
    assert out2.shape == x2.shape and out2.dtype == x2.dtype
    assert jnp.allclose(out2, ref2, atol=1e-6, rtol=1e-6)

    # Tertiary test: bf16 input exercises the internal-f32 path.
    x3 = jax.random.normal(jax.random.PRNGKey(0), (8, 256), dtype=jnp.bfloat16)
    out3 = jax.block_until_ready(stable_softmax(x3))
    ref3 = _reference(x3)
    assert out3.shape == x3.shape and out3.dtype == x3.dtype
    assert jnp.allclose(out3.astype(jnp.float32), ref3.astype(jnp.float32),
                        atol=1e-2, rtol=1e-2)

    print("KERNEL_OK")
</pallas_src>

<mosaic_0001>
module attributes {stable_mosaic.version = 11 : i64} {
  func.func @stable_softmax_kernel(%arg0: i32, %arg1: memref<8x128xf32, #tpu.memory_space<vmem>>, %arg2: memref<8x128xf32, #tpu.memory_space<vmem>>) attributes {dimension_semantics = [#tpu.dimension_semantics<parallel>], iteration_bounds = array<i64: 1>, scalar_prefetch = 0 : i64, scratch_operands = 0 : i64, tpu.core_type = #tpu.core_type<tc>, window_params = [{transform_indices = @transform_0, window_bounds = array<i64: 8, 128>}, {transform_indices = @transform_1, window_bounds = array<i64: 8, 128>}]} {
    %c0 = arith.constant 0 : index
    %c0_0 = arith.constant 0 : index
    %0 = vector.load %arg1[%c0, %c0_0] : memref<8x128xf32, #tpu.memory_space<vmem>>, vector<8x128xf32>
    %cst = arith.constant dense<0xFF800000> : vector<128xf32>
    %1 = vector.multi_reduction <maximumf>, %0, %cst [0] : vector<8x128xf32> to vector<128xf32>
    %2 = vector.shape_cast %1 : vector<128xf32> to vector<1x128xf32>
    %3 = vector.broadcast %2 : vector<1x128xf32> to vector<8x128xf32>
    %4 = arith.subf %0, %3 : vector<8x128xf32>
    %5 = math.exp %4 : vector<8x128xf32>
    %cst_1 = arith.constant dense<0.000000e+00> : vector<128xf32>
    %6 = vector.multi_reduction <add>, %5, %cst_1 [0] : vector<8x128xf32> to vector<128xf32>
    %7 = vector.shape_cast %6 : vector<128xf32> to vector<1x128xf32>
    %8 = tpu.reciprocal %7 : vector<1x128xf32> -> vector<1x128xf32>
    %9 = vector.broadcast %8 : vector<1x128xf32> to vector<8x128xf32>
    %10 = arith.mulf %5, %9 : vector<8x128xf32>
    %c0_2 = arith.constant 0 : index
    %c0_3 = arith.constant 0 : index
    %11 = vector.load %arg2[%c0_2, %c0_3] : memref<8x128xf32, #tpu.memory_space<vmem>>, vector<8x128xf32>
    tpu.vector_store %arg2[%c0_2, %c0_3], %10 {strides = array<i32>} : memref<8x128xf32, #tpu.memory_space<vmem>>, vector<8x128xf32>,
    return
  }
  func.func @transform_0(%arg0: i32) -> (i32, i32) {
    %c0_i32 = arith.constant 0 : i32
    %c0_i32_0 = arith.constant 0 : i32
    return %c0_i32, %arg0 : i32, i32
  }
  func.func @transform_1(%arg0: i32) -> (i32, i32) {
    %c0_i32 = arith.constant 0 : i32
    %c0_i32_0 = arith.constant 0 : i32
    return %c0_i32, %arg0 : i32, i32
  }
}

</mosaic_0001>

<llo_original>
// kernel: tpu_custom_call.1
$region0: #{tpu_custom_call.1}
  #allocation0 [shape = 'u32[]', space=smem, size = 0x4, offset = 0x4, fixed_abs, tag = 'smem constant byte address 0x4 - core index']
  #allocation1 [shape = 'u32[144,128]{1,0:T(1,128)}', space=vmem, size = 0x12000, scoped, tag = 'internal scratch']
  %s0 = inlined_call_operand.hbm [shape: f32[8,128], index: 0, kind: input, shape index: {}]
  %s1 = inlined_call_operand.hbm [shape: f32[8,128], index: 1, kind: output, shape index: {}]
  %s2 = sld [smem:[#allocation0]]
  $region18: #{tpu_custom_call.1} parent=0
    _
  %s4 = ssub.s32 1, %s2
  %s5 = scalar_select 0, %s4, %s2
  $region1: #{tpu_custom_call.1} parent=0
    #allocation2 [shape = 'u8[4096]{0}', space=vmem, size = 0x1000, scoped, tag = 'input window, operand 0, single buffered']
    #allocation3 [shape = 's32[1]{0}', space=sflag, size = 0x4, scoped, tag = 'scoped memory for tpu_custom_call.1']
    #allocation4 [shape = 's32[1]{0}', space=sflag, size = 0x4, scoped, tag = 'scoped memory for tpu_custom_call.1']
    #allocation5 [shape = 'u8[4096]{0}', space=vmem, size = 0x1000, scoped, tag = 'output window, operand 0, single buffered']
    %6 = vsyncpa [#allocation3], 0
    %7 = vsyncpa [#allocation4], 0
    // Predicated region
    $region2: #{tpu_custom_call.1} parent=1 // pred_check
      _
    $region3: #{tpu_custom_call.1} parent=1 // pred_check_branch
      %9 = sbr.rel (0) target = $region5
    $region4: #{tpu_custom_call.1} parent=1 // pred_region
      %s11 = ssub.s32 128, 128
      %12 = vsyncadd [#allocation3], %s11
      %s14 = sshll.u32 [#allocation2], 4
      %s15 = int_to_ptr.vmem [resolvable:$true] %s14
      %17 = dma.hbm_to_vmem [thread:$0]  %s0, 128, %s15, [#allocation3]
    $region5: #{tpu_custom_call.1} parent=1 // pred_fallthru
      _
    // Predicated region
    $region6: #{tpu_custom_call.1} parent=1 // pred_check
      _
    $region7: #{tpu_custom_call.1} parent=1 // pred_check_branch
      %19 = sbr.rel (0) target = $region9
    $region8: #{tpu_custom_call.1} parent=1 // pred_region
      %20 = dma.done [#allocation3], 128
    $region9: #{tpu_custom_call.1} parent=1 // pred_fallthru
      _
    %v21 = vld [vmem:[#allocation2] sm:$0xff]
    %v22 = vrot.slane %v21, 4
    %v23 = vmax.f32 %v21, %v22
    %v24 = vrot.slane %v23, 2
    %v25 = vmax.f32 %v23, %v24
    %v26 = vrot.slane %v25, 1
    %v27 = vmax.f32 %v25, %v26
    %v28 = vsub.f32 %v21, %v27
    %v29 = vmul.f32 %v28, 1.442695
    %v30 = vpow.pop %v29
    %v31 = vrot.slane %v30, 4
    %v32 = vadd.f32 %v30, %v31
    %v33 = vrot.slane %v32, 2
    %v34 = vadd.f32 %v32, %v33
    %v35 = vrot.slane %v34, 1
    %v36 = vadd.f32 %v34, %v35
    %v37 = vrcp.pop %v36
    %v38 = vmul.f32 %v30, %v37
    %39 = vst [vmem:[#allocation5] sm:$0xff] %v38
    // Predicated region
    $region10: #{tpu_custom_call.1} parent=1 // pred_check
      _
    $region11: #{tpu_custom_call.1} parent=1 // pred_check_branch
      %41 = sbr.rel (0) target = $region13
    $region12: #{tpu_custom_call.1} parent=1 // pred_region
      %s43 = ssub.s32 128, 128
      %44 = vsyncadd [#allocation4], %s43
      %s46 = sshll.u32 [#allocation5], 4
      %s47 = int_to_ptr.vmem [resolvable:$true] %s46
      %49 = dma.vmem_to_hbm [thread:$0]  %s47, 128, %s1, [#allocation4]
    $region13: #{tpu_custom_call.1} parent=1 // pred_fallthru
      _
    // Predicated region
    $region14: #{tpu_custom_call.1} parent=1 // pred_check
      _
    $region15: #{tpu_custom_call.1} parent=1 // pred_check_branch
      %51 = sbr.rel (0) target = $region17
    $region16: #{tpu_custom_call.1} parent=1 // pred_region
      %52 = dma.done [#allocation4], 128
    $region17: #{tpu_custom_call.1} parent=1 // pred_fallthru
      _
    %53 = vsyncpa [#allocation3], 1
    %54 = vsyncpa [#allocation4], 1

</llo_original>
